<compile_context>
chip_gen: v6e
topology: v6e:2x2x1
jax: 0.10.0
libtpu: 0.0.40
codegen_flags: <defaults>
</compile_context>

<pallas_src>
import jax
import jax.numpy as jnp
import numpy as np
from jax.experimental import pallas as pl
from jax.experimental.pallas import tpu as pltpu

HID = 100          # true hidden width
HID_PAD = 128      # lane/sublane-padded hidden width


def actor_net_kernel(sT_ref, w1T_ref, bw_ref, u_ref):
    sT = sT_ref[...]                 # (8, TB)        bf16, lane-dense states
    w1T = w1T_ref[...]               # (128, 8)       bf16, rows 100..127 zero
    b1 = bw_ref[:, 0:1]              # (128, 1)       f32, row 100 holds 1.0 (b2 trick)
    w2 = bw_ref[:, 1:2]              # (128, 1)       f32, row 100 holds b2

    # fc: Linear(8 -> 128-padded) + ReLU.  Single MXU pass, f32 accumulation.
    h = jnp.dot(w1T, sT, preferred_element_type=jnp.float32) + b1   # (128, TB)
    h = jnp.maximum(h, 0.0)          # h[100,:] == 1 always; h[101:,:] == 0

    # mu_head: Linear(100 -> 1) + b2 as a VPU multiply + sublane reduce.
    # b2 is included automatically via h[100,:] * w2[100].
    u = jnp.sum(h * w2, axis=0, keepdims=True)                      # (1, TB)

    # action scaling: 2 * tanh  (EUP, full 128-lane vregs)
    u_ref[...] = 2.0 * jnp.tanh(u)


def _round_up(x, m):
    return ((x + m - 1) // m) * m


def actor_net_forward(s, w1T_packed, bw_packed, *, tb=8192):
    """s: (B, 8) f32.  w1T_packed: (128, 8) bf16, bw_packed: (128, 2) f32
    from pack_params().  Returns (B, 1) f32."""
    B = s.shape[0]

    # Number of grid steps: at least ceil(B/tb); keep >=2 steps for moderate
    # batches so v7x's two TensorCores both get work; tiny batches use a
    # single step (no pipeline overhead).
    nsteps = max(pl.cdiv(B, tb), 2 if B >= 256 else 1)
    TB = _round_up(pl.cdiv(B, nsteps), 128)      # lane quantum = 128
    B_pad = nsteps * TB

    # Lane-dense, bf16 state slab: (8, B_pad).  Padded batch columns are zero
    # and are sliced off below, so they are harmless.
    sT = s.astype(jnp.bfloat16).T
    if B_pad != B:
        sT = jnp.pad(sT, ((0, 0), (0, B_pad - B)))

    cost = pl.CostEstimate(
        flops=2 * B_pad * 8 * HID_PAD + 2 * B_pad * HID_PAD,
        transcendentals=B_pad,
        bytes_accessed=(8 * B_pad * 2          # bf16 states in
                        + B_pad * 4            # f32 actions out
                        + HID_PAD * 8 * 2      # W1^T (bf16)
                        + HID_PAD * 2 * 4),    # b1 | w2 (f32)
    )

    out = pl.pallas_call(
        actor_net_kernel,
        out_shape=jax.ShapeDtypeStruct((1, B_pad), jnp.float32),
        grid=(nsteps,),
        in_specs=[
            pl.BlockSpec((8, TB), lambda i: (0, i)),          # stream states
            pl.BlockSpec((HID_PAD, 8), lambda i: (0, 0)),     # W1^T resident
            pl.BlockSpec((HID_PAD, 2), lambda i: (0, 0)),     # b1|w2 resident
        ],
        out_specs=pl.BlockSpec((1, TB), lambda i: (0, i)),    # lane-dense out
        compiler_params=pltpu.CompilerParams(
            dimension_semantics=("parallel",)),
        cost_estimate=cost,
    )(sT, w1T_packed, bw_packed)

    return out[0, :B].reshape(B, 1)


def init_params(key):
    # Deterministic synthetic init mimicking PyTorch's default Linear init
    # (uniform(-1/sqrt(fan_in), 1/sqrt(fan_in))).
    k1, k2, k3, k4 = jax.random.split(key, 4)
    bound1 = 1.0 / np.sqrt(8.0)
    bound2 = 1.0 / np.sqrt(HID)
    w1 = jax.random.uniform(k1, (8, HID), jnp.float32, -bound1, bound1)
    b1 = jax.random.uniform(k2, (1, HID), jnp.float32, -bound1, bound1)
    w2 = jax.random.uniform(k3, (HID, 1), jnp.float32, -bound2, bound2)
    b2 = jax.random.uniform(k4, (1, 1), jnp.float32, -bound2, bound2)
    return w1, b1, w2, b2


def pack_params(w1, b1, w2, b2):
    """Pack params for the transposed (batch-on-lanes) kernel.  Done once.
    Returns (W1^T as (128, 8) bf16,  [b1 | w2] as (128, 2) f32)."""
    w1T = np.zeros((HID_PAD, 8), np.float32)
    w1T[:HID, :] = np.asarray(w1).T               # rows 100..127 stay zero
    bw = np.zeros((HID_PAD, 2), np.float32)
    bw[:HID, 0] = np.asarray(b1).reshape(-1)
    bw[HID, 0] = 1.0                              # sentinel hidden unit -> relu(1)==1
    bw[:HID, 1] = np.asarray(w2).reshape(-1)
    bw[HID, 1] = float(np.asarray(b2).reshape(()))  # b2 rides on that unit
    return jnp.asarray(w1T, jnp.bfloat16), jnp.asarray(bw, jnp.float32)


def reference_f32(s, w1, b1, w2, b2):
    return 2.0 * jnp.tanh(jnp.maximum(s @ w1 + b1, 0.0) @ w2 + b2)


def reference_bf16(s, w1, b1, w2, b2):
    # Mimics kernel numerics: bf16 layer-1 operands, f32 everything else.
    sb = s.astype(jnp.bfloat16).astype(jnp.float32)
    wb = w1.astype(jnp.bfloat16).astype(jnp.float32)
    h = jnp.maximum(sb @ wb + b1, 0.0)
    return 2.0 * jnp.tanh(h @ w2 + b2)


if __name__ == "__main__":
    key = jax.random.PRNGKey(0)
    k_in, k_in2, k_par = jax.random.split(key, 3)

    w1, b1, w2, b2 = init_params(k_par)
    w1T_p, bw_p = pack_params(w1, b1, w2, b2)

    # Small batch: single grid step (latency path).
    B = 8
    s = jax.random.normal(k_in, (B, 8), dtype=jnp.float32)
    u = jax.block_until_ready(actor_net_forward(s, w1T_p, bw_p))
    np.testing.assert_allclose(np.asarray(u),
                               np.asarray(reference_bf16(s, w1, b1, w2, b2)),
                               rtol=1e-4, atol=1e-4)
    np.testing.assert_allclose(np.asarray(u),
                               np.asarray(reference_f32(s, w1, b1, w2, b2)),
                               rtol=0.0, atol=3e-2)

    # Larger non-multiple batch: exercises the multi-step grid (>=2 steps for
    # v7x megacore) + batch padding path.
    B2 = 520
    s2 = jax.random.normal(k_in2, (B2, 8), dtype=jnp.float32)
    u2 = jax.block_until_ready(actor_net_forward(s2, w1T_p, bw_p))
    np.testing.assert_allclose(np.asarray(u2),
                               np.asarray(reference_bf16(s2, w1, b1, w2, b2)),
                               rtol=1e-4, atol=1e-4)
    np.testing.assert_allclose(np.asarray(u2),
                               np.asarray(reference_f32(s2, w1, b1, w2, b2)),
                               rtol=0.0, atol=3e-2)

    print("KERNEL_OK")
</pallas_src>

<mosaic_0001>
module attributes {stable_mosaic.version = 11 : i64} {
  func.func @actor_net_kernel(%arg0: i32, %arg1: memref<8x128xbf16, #tpu.memory_space<vmem>>, %arg2: memref<128x8xbf16, #tpu.memory_space<vmem>>, %arg3: memref<128x2xf32, #tpu.memory_space<vmem>>, %arg4: memref<1x128xf32, #tpu.memory_space<vmem>>) attributes {dimension_semantics = [#tpu.dimension_semantics<parallel>], iteration_bounds = array<i64: 1>, scalar_prefetch = 0 : i64, scratch_operands = 0 : i64, tpu.core_type = #tpu.core_type<tc>, window_params = [{transform_indices = @transform_0, window_bounds = array<i64: 8, 128>}, {pipeline_mode = #tpu.pipeline_mode<synchronous>, transform_indices = @transform_1, window_bounds = array<i64: 128, 8>}, {pipeline_mode = #tpu.pipeline_mode<synchronous>, transform_indices = @transform_2, window_bounds = array<i64: 128, 2>}, {transform_indices = @transform_3, window_bounds = array<i64: 1, 128>}]} {
    %c0 = arith.constant 0 : index
    %c0_0 = arith.constant 0 : index
    %0 = vector.load %arg1[%c0, %c0_0] : memref<8x128xbf16, #tpu.memory_space<vmem>>, vector<8x128xbf16>
    %c0_1 = arith.constant 0 : index
    %c0_2 = arith.constant 0 : index
    %1 = vector.load %arg2[%c0_1, %c0_2] : memref<128x8xbf16, #tpu.memory_space<vmem>>, vector<128x8xbf16>
    %c0_3 = arith.constant 0 : index
    %c0_4 = arith.constant 0 : index
    %2 = vector.load %arg3[%c0_3, %c0_4] : memref<128x2xf32, #tpu.memory_space<vmem>>, vector<128x1xf32>
    %c0_5 = arith.constant 0 : index
    %c1 = arith.constant 1 : index
    %3 = vector.load %arg3[%c0_5, %c1] : memref<128x2xf32, #tpu.memory_space<vmem>>, vector<128x1xf32>
    %cst = arith.constant dense<0.000000e+00> : vector<128x128xf32>
    %4 = tpu.matmul %1, %0, %cst {dimension_numbers = #tpu.dot_dimension_numbers<[1], [0], [0], [1], [0, 0, 1, 1], [], []>} : vector<128x8xbf16>, vector<8x128xbf16>, vector<128x128xf32> -> vector<128x128xf32>
    %5 = vector.broadcast %2 : vector<128x1xf32> to vector<128x128xf32>
    %6 = arith.addf %4, %5 : vector<128x128xf32>
    %cst_6 = arith.constant 0.000000e+00 : f32
    %7 = vector.broadcast %cst_6 : f32 to vector<128x128xf32>
    %8 = arith.maximumf %6, %7 : vector<128x128xf32>
    %9 = vector.broadcast %3 : vector<128x1xf32> to vector<128x128xf32>
    %10 = arith.mulf %8, %9 : vector<128x128xf32>
    %cst_7 = arith.constant dense<0.000000e+00> : vector<128xf32>
    %11 = vector.multi_reduction <add>, %10, %cst_7 [0] : vector<128x128xf32> to vector<128xf32>
    %12 = vector.shape_cast %11 : vector<128xf32> to vector<1x128xf32>
    %13 = math.tanh %12 : vector<1x128xf32>
    %cst_8 = arith.constant 2.000000e+00 : f32
    %14 = vector.broadcast %cst_8 : f32 to vector<1x128xf32>
    %15 = arith.mulf %14, %13 : vector<1x128xf32>
    %c0_9 = arith.constant 0 : index
    %c0_10 = arith.constant 0 : index
    %16 = vector.load %arg4[%c0_9, %c0_10] : memref<1x128xf32, #tpu.memory_space<vmem>>, vector<1x128xf32>
    tpu.vector_store %arg4[%c0_9, %c0_10], %15 {strides = array<i32>} : memref<1x128xf32, #tpu.memory_space<vmem>>, vector<1x128xf32>,
    return
  }
  func.func @transform_0(%arg0: i32) -> (i32, i32) {
    %c0_i32 = arith.constant 0 : i32
    %c0_i32_0 = arith.constant 0 : i32
    return %c0_i32, %arg0 : i32, i32
  }
  func.func @transform_1(%arg0: i32) -> (i32, i32) {
    %c0_i32 = arith.constant 0 : i32
    %c0_i32_0 = arith.constant 0 : i32
    %c0_i32_1 = arith.constant 0 : i32
    return %c0_i32, %c0_i32_0 : i32, i32
  }
  func.func @transform_2(%arg0: i32) -> (i32, i32) {
    %c0_i32 = arith.constant 0 : i32
    %c0_i32_0 = arith.constant 0 : i32
    %c0_i32_1 = arith.constant 0 : i32
    return %c0_i32, %c0_i32_0 : i32, i32
  }
  func.func @transform_3(%arg0: i32) -> (i32, i32) {
    %c0_i32 = arith.constant 0 : i32
    %c0_i32_0 = arith.constant 0 : i32
    return %c0_i32, %arg0 : i32, i32
  }
}

</mosaic_0001>

<llo_original>
// kernel: tpu_custom_call.1
$region0: #{tpu_custom_call.1}
  #allocation0 [shape = 'u32[]', space=smem, size = 0x4, offset = 0x4, fixed_abs, tag = 'smem constant byte address 0x4 - core index']
  #allocation1 [shape = 'u32[144,128]{1,0:T(1,128)}', space=vmem, size = 0x12000, scoped, tag = 'internal scratch']
  %s0 = inlined_call_operand.vmem [shape: bf16[8,128], index: 0, kind: input, shape index: {}]
  %s1 = inlined_call_operand.vmem [shape: bf16[128,8], index: 1, kind: input, shape index: {}]
  %s2 = inlined_call_operand.vmem [shape: f32[128,2], index: 2, kind: input, shape index: {}]
  %s3 = inlined_call_operand.hbm [shape: f32[1,128], index: 3, kind: output, shape index: {}]
  %s4 = sld [smem:[#allocation0]]
  $region22: #{tpu_custom_call.1} parent=0
    _
  %s6 = ssub.s32 1, %s4
  %s7 = scalar_select 0, %s6, %s4
  $region1: #{tpu_custom_call.1} parent=0
    #allocation2 [shape = 'u8[512]{0}', space=vmem, size = 0x400, scoped, tag = 'output window, operand 0, single buffered']
    #allocation3 [shape = 's32[1]{0}', space=sflag, size = 0x4, scoped, tag = 'scoped memory for tpu_custom_call.1']
    %8 = vsyncpa [#allocation3], 0
    // Predicated region
    $region2: #{tpu_custom_call.1} parent=1 // pred_check
      _
    $region3: #{tpu_custom_call.1} parent=1 // pred_check_branch
      %10 = sbr.rel (0) target = $region5
    $region4: #{tpu_custom_call.1} parent=1 // pred_region
      _
    $region5: #{tpu_custom_call.1} parent=1 // pred_fallthru
      _
    // Predicated region
    $region6: #{tpu_custom_call.1} parent=1 // pred_check
      _
    $region7: #{tpu_custom_call.1} parent=1 // pred_check_branch
      %12 = sbr.rel (0) target = $region9
    $region8: #{tpu_custom_call.1} parent=1 // pred_region
      _
    $region9: #{tpu_custom_call.1} parent=1 // pred_fallthru
      _
    // Predicated region
    $region10: #{tpu_custom_call.1} parent=1 // pred_check
      _
    $region11: #{tpu_custom_call.1} parent=1 // pred_check_branch
      %14 = sbr.rel (0) target = $region13
    $region12: #{tpu_custom_call.1} parent=1 // pred_region
      _
    $region13: #{tpu_custom_call.1} parent=1 // pred_fallthru
      _
    %v16 = vld [vmem:[%s0] sm:$0xf]
    %v17 = vld [vmem:[%s1] sm:$0xf]
    %v18 = vld [vmem:[%s1 + $0x4] sm:$0xf]
    %v19 = vld [vmem:[%s1 + $0x8] sm:$0xf]
    %v20 = vld [vmem:[%s1 + $0xc] sm:$0xf]
    %v21 = vld [vmem:[%s1 + $0x10] sm:$0xf]
    %v22 = vld [vmem:[%s1 + $0x14] sm:$0xf]
    %v23 = vld [vmem:[%s1 + $0x18] sm:$0xf]
    %v24 = vld [vmem:[%s1 + $0x1c] sm:$0xf]
    %v25 = vld [vmem:[%s1 + $0x20] sm:$0xf]
    %v26 = vld [vmem:[%s1 + $0x24] sm:$0xf]
    %v27 = vld [vmem:[%s1 + $0x28] sm:$0xf]
    %v28 = vld [vmem:[%s1 + $0x2c] sm:$0xf]
    %v29 = vld [vmem:[%s1 + $0x30] sm:$0xf]
    %v30 = vld [vmem:[%s1 + $0x34] sm:$0xf]
    %v31 = vld [vmem:[%s1 + $0x38] sm:$0xf]
    %v32 = vld [vmem:[%s1 + $0x3c] sm:$0xf]
    %v33 = vld [vmem:[%s2] sm:$0xff]
    %v34 = vld [vmem:[%s2 + $0x8] sm:$0xff]
    %v35 = vld [vmem:[%s2 + $0x10] sm:$0xff]
    %v36 = vld [vmem:[%s2 + $0x18] sm:$0xff]
    %v37 = vld [vmem:[%s2 + $0x20] sm:$0xff]
    %v38 = vld [vmem:[%s2 + $0x28] sm:$0xff]
    %v39 = vld [vmem:[%s2 + $0x30] sm:$0xff]
    %v40 = vld [vmem:[%s2 + $0x38] sm:$0xff]
    %v41 = vld [vmem:[%s2 + $0x40] sm:$0xff]
    %v42 = vld [vmem:[%s2 + $0x48] sm:$0xff]
    %v43 = vld [vmem:[%s2 + $0x50] sm:$0xff]
    %v44 = vld [vmem:[%s2 + $0x58] sm:$0xff]
    %v45 = vld [vmem:[%s2 + $0x60] sm:$0xff]
    %v46 = vld [vmem:[%s2 + $0x68] sm:$0xff]
    %v47 = vld [vmem:[%s2 + $0x70] sm:$0xff]
    %v48 = vld [vmem:[%s2 + $0x78] sm:$0xff]
    %50 = vset.pattern.permute.xlu0 0
    %51 = vperm.xlu0 %50, %v33
    %v52 = vpop.permute.xlu0 %51
    %55 = vset.pattern.permute.xlu0 0
    %56 = vperm.xlu0 %55, %v34
    %v57 = vpop.permute.xlu0 %56
    %60 = vset.pattern.permute.xlu0 0
    %61 = vperm.xlu0 %60, %v35
    %v62 = vpop.permute.xlu0 %61
    %65 = vset.pattern.permute.xlu0 0
    %66 = vperm.xlu0 %65, %v36
    %v67 = vpop.permute.xlu0 %66
    %70 = vset.pattern.permute.xlu0 0
    %71 = vperm.xlu0 %70, %v37
    %v72 = vpop.permute.xlu0 %71
    %75 = vset.pattern.permute.xlu0 0
    %76 = vperm.xlu0 %75, %v38
    %v77 = vpop.permute.xlu0 %76
    %80 = vset.pattern.permute.xlu0 0
    %81 = vperm.xlu0 %80, %v39
    %v82 = vpop.permute.xlu0 %81
    %85 = vset.pattern.permute.xlu0 0
    %86 = vperm.xlu0 %85, %v40
    %v87 = vpop.permute.xlu0 %86
    %90 = vset.pattern.permute.xlu0 0
    %91 = vperm.xlu0 %90, %v41
    %v92 = vpop.permute.xlu0 %91
    %95 = vset.pattern.permute.xlu0 0
    %96 = vperm.xlu0 %95, %v42
    %v97 = vpop.permute.xlu0 %96
    %100 = vset.pattern.permute.xlu0 0
    %101 = vperm.xlu0 %100, %v43
    %v102 = vpop.permute.xlu0 %101
    %105 = vset.pattern.permute.xlu0 0
    %106 = vperm.xlu0 %105, %v44
    %v107 = vpop.permute.xlu0 %106
    %110 = vset.pattern.permute.xlu0 0
    %111 = vperm.xlu0 %110, %v45
    %v112 = vpop.permute.xlu0 %111
    %115 = vset.pattern.permute.xlu0 0
    %116 = vperm.xlu0 %115, %v46
    %v117 = vpop.permute.xlu0 %116
    %120 = vset.pattern.permute.xlu0 0
    %121 = vperm.xlu0 %120, %v47
    %v122 = vpop.permute.xlu0 %121
    %125 = vset.pattern.permute.xlu0 0
    %126 = vperm.xlu0 %125, %v48
    %v127 = vpop.permute.xlu0 %126
    %v145 = vunpack.c.l.b16 %v17
    %v146 = vunpack.c.l.b16 %v18
    %v147 = vunpack.c.l.b16 %v19
    %v148 = vunpack.c.l.b16 %v20
    %v149 = vunpack.c.l.b16 %v21
    %v150 = vunpack.c.l.b16 %v22
    %v151 = vunpack.c.l.b16 %v23
    %v152 = vunpack.c.l.b16 %v24
    %v153 = vunpack.c.l.b16 %v25
    %v154 = vunpack.c.l.b16 %v26
    %v155 = vunpack.c.l.b16 %v27
    %v156 = vunpack.c.l.b16 %v28
    %v157 = vunpack.c.l.b16 %v29
    %v158 = vunpack.c.l.b16 %v30
    %v159 = vunpack.c.l.b16 %v31
    %v160 = vunpack.c.l.b16 %v32
    %v161 = vpack.c.b16 %v146, %v145
    %v162 = vpack.c.b16 %v148, %v147
    %v163 = vpack.c.b16 %v150, %v149
    %v164 = vpack.c.b16 %v152, %v151
    %v165 = vpack.c.b16 %v154, %v153
    %v166 = vpack.c.b16 %v156, %v155
    %v167 = vpack.c.b16 %v158, %v157
    %v168 = vpack.c.b16 %v160, %v159
    %vm169 = vcmask 64512
    %v171 = vsel %vm169, %v161, 0
    %v174 = vsel %vm169, %v162, 0
    %v177 = vsel %vm169, %v163, 0
    %v180 = vsel %vm169, %v164, 0
    %v183 = vsel %vm169, %v165, 0
    %v186 = vsel %vm169, %v166, 0
    %v189 = vsel %vm169, %v167, 0
    %v192 = vsel %vm169, %v168, 0
    %vm194 = vcmask 1043456
    %v196 = vsel %vm194, %v16, 0
    %198 = vmatprep.subr.bf16.mxu0 0
    %199 = vmatpush1.bf16.msra.mxu0 0
    %200 = vmatprep.subr.bf16.mxu0 0
    %201 = vmatpush1.bf16.msra.mxu0 0
    %202 = vmatprep.subr.bf16.mxu0 0
    %203 = vmatpush1.bf16.msra.mxu0 0
    %204 = vmatprep.subr.bf16.mxu0 0
    %205 = vmatpush1.bf16.msra.mxu0 0
    %206 = vmatprep.subr.bf16.mxu0 0
    %207 = vmatpush1.bf16.msra.mxu0 0
    %208 = vmatprep.subr.bf16.mxu0 0
    %209 = vmatpush1.bf16.msra.mxu0 0
    %210 = vmatprep.subr.bf16.mxu0 0
    %211 = vmatpush1.bf16.msra.mxu0 0
    %212 = vmatprep.subr.bf16.mxu0 0
    %213 = vmatpush1.bf16.msra.mxu0 %v196
    %214 = vmatprep.subr.bf16.mxu0 0
    %215 = vmatpush2.bf16.msra.mxu0 0
    %216 = vmatprep.subr.bf16.mxu0 0
    %217 = vmatpush2.bf16.msra.mxu0 0
    %218 = vmatprep.subr.bf16.mxu0 0
    %219 = vmatpush2.bf16.msra.mxu0 0
    %220 = vmatprep.subr.bf16.mxu0 0
    %221 = vmatpush2.bf16.msra.mxu0 0
    %222 = vmatprep.subr.bf16.mxu0 0
    %223 = vmatpush2.bf16.msra.mxu0 0
    %224 = vmatprep.subr.bf16.mxu0 0
    %225 = vmatpush2.bf16.msra.mxu0 0
    %226 = vmatprep.subr.bf16.mxu0 0
    %227 = vmatpush2.bf16.msra.mxu0 0
    %228 = vmatprep.subr.bf16.mxu0 0
    %229 = vmatpush2.bf16.msra.mxu0 0
    %230 = vmatprep.mubr.bf16.mxu0 0
    %231 = vmatmul.mubr.bf16.gmra.mxu0 %v171
    %v232 = vpop.f32.mrf.mxu0
    %v233 = vadd.f32 %v52, %v232
    %v234 = vpop.f32.mrf.mxu0
    %v235 = vpop.f32.mrf.mxu0
    %v236 = vadd.f32 %v57, %v235
    %v237 = vpop.f32.mrf.mxu0
    %238 = vmatprep.mubr.bf16.mxu0 0
    %239 = vmatmul.mubr.bf16.gmra.mxu0 %v174
    %v240 = vpop.f32.mrf.mxu0
    %v241 = vadd.f32 %v62, %v240
    %v242 = vpop.f32.mrf.mxu0
    %v243 = vpop.f32.mrf.mxu0
    %v244 = vadd.f32 %v67, %v243
    %v245 = vpop.f32.mrf.mxu0
    %246 = vmatprep.mubr.bf16.mxu0 0
    %247 = vmatmul.mubr.bf16.gmra.mxu0 %v177
    %v248 = vpop.f32.mrf.mxu0
    %v249 = vadd.f32 %v72, %v248
    %v250 = vpop.f32.mrf.mxu0
    %v251 = vpop.f32.mrf.mxu0
    %v252 = vadd.f32 %v77, %v251
    %v253 = vpop.f32.mrf.mxu0
    %254 = vmatprep.mubr.bf16.mxu0 0
    %255 = vmatmul.mubr.bf16.gmra.mxu0 %v180
    %v256 = vpop.f32.mrf.mxu0
    %v257 = vadd.f32 %v82, %v256
    %v258 = vpop.f32.mrf.mxu0
    %v259 = vpop.f32.mrf.mxu0
    %v260 = vadd.f32 %v87, %v259
    %v261 = vpop.f32.mrf.mxu0
    %262 = vmatprep.mubr.bf16.mxu0 0
    %263 = vmatmul.mubr.bf16.gmra.mxu0 %v183
    %v264 = vpop.f32.mrf.mxu0
    %v265 = vadd.f32 %v92, %v264
    %v266 = vpop.f32.mrf.mxu0
    %v267 = vpop.f32.mrf.mxu0
    %v268 = vadd.f32 %v97, %v267
    %v269 = vpop.f32.mrf.mxu0
    %270 = vmatprep.mubr.bf16.mxu0 0
    %271 = vmatmul.mubr.bf16.gmra.mxu0 %v186
    %v272 = vpop.f32.mrf.mxu0
    %v273 = vadd.f32 %v102, %v272
    %v274 = vpop.f32.mrf.mxu0
    %v275 = vpop.f32.mrf.mxu0
    %v276 = vadd.f32 %v107, %v275
    %v277 = vpop.f32.mrf.mxu0
    %278 = vmatprep.mubr.bf16.mxu0 0
    %279 = vmatmul.mubr.bf16.gmra.mxu0 %v189
    %v280 = vpop.f32.mrf.mxu0
    %v281 = vadd.f32 %v112, %v280
    %v282 = vpop.f32.mrf.mxu0
    %v283 = vpop.f32.mrf.mxu0
    %v284 = vadd.f32 %v117, %v283
    %v285 = vpop.f32.mrf.mxu0
    %286 = vmatprep.mubr.bf16.mxu0 0
    %287 = vmatmul.mubr.bf16.gmra.mxu0 %v192
    %v288 = vpop.f32.mrf.mxu0
    %v289 = vadd.f32 %v122, %v288
    %v290 = vpop.f32.mrf.mxu0
    %v291 = vpop.f32.mrf.mxu0
    %v292 = vadd.f32 %v127, %v291
    %v293 = vpop.f32.mrf.mxu0
    %294 = vdwg.mxu0
    %v295 = vmax.f32 %v233, 0.0
    %v296 = vmax.f32 %v236, 0.0
    %v297 = vmax.f32 %v241, 0.0
    %v298 = vmax.f32 %v244, 0.0
    %v299 = vmax.f32 %v249, 0.0
    %v300 = vmax.f32 %v252, 0.0
    %v301 = vmax.f32 %v257, 0.0
    %v302 = vmax.f32 %v260, 0.0
    %v303 = vmax.f32 %v265, 0.0
    %v304 = vmax.f32 %v268, 0.0
    %v305 = vmax.f32 %v273, 0.0
    %v306 = vmax.f32 %v276, 0.0
    %v307 = vmax.f32 %v281, 0.0
    %v308 = vmax.f32 %v284, 0.0
    %v309 = vmax.f32 %v289, 0.0
    %v310 = vmax.f32 %v292, 0.0
    %311 = vset.pattern.permute.xlu0 1
    %312 = vperm.xlu0 %311, %v33
    %v313 = vpop.permute.xlu0 %312
    %315 = vset.pattern.permute.xlu0 1
    %316 = vperm.xlu0 %315, %v34
    %v317 = vpop.permute.xlu0 %316
    %319 = vset.pattern.permute.xlu0 1
    %320 = vperm.xlu0 %319, %v35
    %v321 = vpop.permute.xlu0 %320
    %323 = vset.pattern.permute.xlu0 1
    %324 = vperm.xlu0 %323, %v36
    %v325 = vpop.permute.xlu0 %324
    %327 = vset.pattern.permute.xlu0 1
    %328 = vperm.xlu0 %327, %v37
    %v329 = vpop.permute.xlu0 %328
    %331 = vset.pattern.permute.xlu0 1
    %332 = vperm.xlu0 %331, %v38
    %v333 = vpop.permute.xlu0 %332
    %335 = vset.pattern.permute.xlu0 1
    %336 = vperm.xlu0 %335, %v39
    %v337 = vpop.permute.xlu0 %336
    %339 = vset.pattern.permute.xlu0 1
    %340 = vperm.xlu0 %339, %v40
    %v341 = vpop.permute.xlu0 %340
    %343 = vset.pattern.permute.xlu0 1
    %344 = vperm.xlu0 %343, %v41
    %v345 = vpop.permute.xlu0 %344
    %347 = vset.pattern.permute.xlu0 1
    %348 = vperm.xlu0 %347, %v42
    %v349 = vpop.permute.xlu0 %348
    %351 = vset.pattern.permute.xlu0 1
    %352 = vperm.xlu0 %351, %v43
    %v353 = vpop.permute.xlu0 %352
    %355 = vset.pattern.permute.xlu0 1
    %356 = vperm.xlu0 %355, %v44
    %v357 = vpop.permute.xlu0 %356
    %359 = vset.pattern.permute.xlu0 1
    %360 = vperm.xlu0 %359, %v45
    %v361 = vpop.permute.xlu0 %360
    %363 = vset.pattern.permute.xlu0 1
    %364 = vperm.xlu0 %363, %v46
    %v365 = vpop.permute.xlu0 %364
    %367 = vset.pattern.permute.xlu0 1
    %368 = vperm.xlu0 %367, %v47
    %v369 = vpop.permute.xlu0 %368
    %371 = vset.pattern.permute.xlu0 1
    %372 = vperm.xlu0 %371, %v48
    %v373 = vpop.permute.xlu0 %372
    %v375 = vmul.f32 %v295, %v313
    %v376 = vmul.f32 %v296, %v317
    %v377 = vmul.f32 %v297, %v321
    %v378 = vmul.f32 %v298, %v325
    %v379 = vmul.f32 %v299, %v329
    %v380 = vmul.f32 %v300, %v333
    %v381 = vmul.f32 %v301, %v337
    %v382 = vmul.f32 %v302, %v341
    %v383 = vmul.f32 %v303, %v345
    %v384 = vmul.f32 %v304, %v349
    %v385 = vmul.f32 %v305, %v353
    %v386 = vmul.f32 %v306, %v357
    %v387 = vmul.f32 %v307, %v361
    %v388 = vmul.f32 %v308, %v365
    %v389 = vmul.f32 %v309, %v369
    %v390 = vmul.f32 %v310, %v373
    %v391 = vadd.f32 %v375, %v376
    %v392 = vadd.f32 %v391, %v377
    %v393 = vadd.f32 %v392, %v378
    %v394 = vadd.f32 %v393, %v379
    %v395 = vadd.f32 %v394, %v380
    %v396 = vadd.f32 %v395, %v381
    %v397 = vadd.f32 %v396, %v382
    %v398 = vadd.f32 %v397, %v383
    %v399 = vadd.f32 %v398, %v384
    %v400 = vadd.f32 %v399, %v385
    %v401 = vadd.f32 %v400, %v386
    %v402 = vadd.f32 %v401, %v387
    %v403 = vadd.f32 %v402, %v388
    %v404 = vadd.f32 %v403, %v389
    %v405 = vadd.f32 %v404, %v390
    %v406 = vrot.slane %v405, 4
    %v407 = vadd.f32 %v405, %v406
    %v408 = vrot.slane %v407, 2
    %v409 = vadd.f32 %v407, %v408
    %v410 = vrot.slane %v409, 1
    %v411 = vadd.f32 %v409, %v410
    %v412 = vtanh.pop %v411
    %v413 = vmul.f32 %v412, 2.0
    %414 = vst [vmem:[#allocation2] sm:$0x1] %v413
    // Predicated region
    $region14: #{tpu_custom_call.1} parent=1 // pred_check
      _
    $region15: #{tpu_custom_call.1} parent=1 // pred_check_branch
      %416 = sbr.rel (0) target = $region17
    $region16: #{tpu_custom_call.1} parent=1 // pred_region
      %s418 = ssub.s32 16, 16
      %419 = vsyncadd [#allocation3], %s418
      %s421 = sshll.u32 [#allocation2], 4
      %s422 = int_to_ptr.vmem [resolvable:$true] %s421
      %424 = dma.vmem_to_hbm [thread:$0]  %s422, 16, %s3, [#allocation3]
    $region17: #{tpu_custom_call.1} parent=1 // pred_fallthru
      _
    // Predicated region
    $region18: #{tpu_custom_call.1} parent=1 // pred_check
      _
    $region19: #{tpu_custom_call.1} parent=1 // pred_check_branch
      %426 = sbr.rel (0) target = $region21
    $region20: #{tpu_custom_call.1} parent=1 // pred_region
      %427 = dma.done [#allocation3], 16
    $region21: #{tpu_custom_call.1} parent=1 // pred_fallthru
      _
    %428 = vsyncpa [#allocation3], 1

</llo_original>
